<compile_context>
chip_gen: v5e
topology: v5e:2x2
jax: 0.10.0
libtpu: 0.0.40
codegen_flags: <defaults>
</compile_context>

<pallas_src>
import functools

import jax
import jax.numpy as jnp
from jax import lax
from jax.experimental import pallas as pl
from jax.experimental.pallas import tpu as pltpu

ALPHA = 0.25
GAMMA = 2.0
EPS = 1e-05

_LANES = 128
_SUBLANES = 8
_DEFAULT_TILE_ROWS = 4096   # 4096 * 128 * 4B = 2 MiB per f32 input tile/buffer


def _round_up(x, m):
    return -(-x // m) * m


def _sublane_multiple(dtype):
    # Minimum sublane tiling of a *chunked* block for this dtype
    # (f32 -> 8, bf16 -> 16, int8 -> 32).
    return _SUBLANES * max(1, 4 // jnp.dtype(dtype).itemsize)


def _modulating_factor(one_m_pt, gamma):
    """(1 - pt) ** gamma with a cheap VPU path for small integer gamma."""
    g = float(gamma)
    if g == 0.0:
        return None                        # factor is 1 -> skip the multiply
    if g.is_integer() and 0 < g <= 4:
        mod = one_m_pt
        for _ in range(int(g) - 1):
            mod = mod * one_m_pt           # gamma == 2 -> one VPU multiply
        return mod
    return one_m_pt ** gamma               # generic (EUP log + exp)


def _focal_iou_kernel(pred_ref, gt_ref, facc_ref, pgacc_ref, iacc_ref, *,
                      gamma, binary_gt, tile_rows, last_chunk_rows):
    # pred_ref / gt_ref : (tile_rows, 128) dense tile of one batch element.
    # facc/pgacc/iacc   : (8, 128) resident output accumulators for batch i.
    k = pl.program_id(1)

    @pl.when(k == 0)
    def _init():
        facc_ref[...] = jnp.zeros_like(facc_ref)
        pgacc_ref[...] = jnp.zeros_like(pgacc_ref)
        iacc_ref[...] = jnp.zeros_like(iacc_ref)

    p = pred_ref[...].astype(jnp.float32)
    g = gt_ref[...].astype(jnp.float32)

    if last_chunk_rows is not None:
        # Ragged last chunk: rows past the end of the array hold unspecified
        # data -> zero them (zero pred & gt are inert for every loss term).
        valid = jnp.where(k == pl.num_programs(1) - 1,
                          last_chunk_rows, tile_rows)
        row_id = lax.broadcasted_iota(jnp.int32, p.shape, 0)
        keep = row_id < valid
        p = jnp.where(keep, p, 0.0)
        g = jnp.where(keep, g, 0.0)

    pt = jnp.where(g == 1.0, p, 1.0 - p)
    mod = _modulating_factor(1.0 - pt, gamma)

    if binary_gt:
        # gt in {0, 1}: BCE == -clamp(log(pt), -100) -> one log per element.
        # Sign and alpha are folded into the wrapper finalize.
        log_pt = jnp.maximum(jnp.log(pt), -100.0)
        focal_elem = log_pt if mod is None else mod * log_pt
    else:
        # Soft-label path: exact PyTorch binary_cross_entropy blend (2 logs).
        log_p = jnp.maximum(jnp.log(p), -100.0)
        log_1mp = jnp.maximum(jnp.log(1.0 - p), -100.0)
        bce = -(g * log_p + (1.0 - g) * log_1mp)
        focal_elem = bce if mod is None else mod * bce

    def fold(x):
        # (tile_rows, 128) -> (tile_rows//8, 8, 128) -> (8, 128): pure vreg
        # adds on the VPU; cross-lane XLU work deferred to the wrapper.
        return jnp.sum(x.reshape(tile_rows // _SUBLANES, _SUBLANES, _LANES),
                       axis=0)

    facc_ref[...] += fold(focal_elem)
    pgacc_ref[...] += fold(p + g)
    iacc_ref[...] += fold(p * g)


def binary_focal_iou(pred, gt, alpha=ALPHA, gamma=GAMMA, eps=EPS,
                     binary_gt=True, max_tile_rows=_DEFAULT_TILE_ROWS,
                     vmem_limit_bytes=None):
    """Forward pass of BinaryFocalIoU. Set binary_gt=False for soft labels."""
    assert pred.shape == gt.shape and pred.ndim == 4
    n, c, h, w = pred.shape
    chw = c * h * w

    # Lane/sublane-dense layout: each batch row becomes (rows, 128) with rows a
    # multiple of 8.  Zero padding is only materialized when CHW is not already
    # a multiple of 8*128; no dtype upcast is done in the wrapper.
    chw_pad = _round_up(chw, _SUBLANES * _LANES)
    rows = chw_pad // _LANES

    def prep(x):
        x = x.reshape(n, chw)
        if chw_pad != chw:
            x = jnp.pad(x, ((0, 0), (0, chw_pad - chw)))
        return x.reshape(n, rows, _LANES)

    pred3, gt3 = prep(pred), prep(gt)

    # Tile selection: multiple of the dtype sublane tiling when chunking, or
    # the full row count (single chunk).  Ragged last chunk -> in-kernel mask.
    sub = max(_sublane_multiple(pred.dtype), _sublane_multiple(gt.dtype))
    req = _round_up(max(int(max_tile_rows), sub), sub)
    if rows <= req:
        tile_rows, num_k, last_chunk_rows = rows, 1, None
    else:
        tile_rows = req
        num_k = pl.cdiv(rows, tile_rows)
        rem = rows % tile_rows
        last_chunk_rows = rem if rem else None

    kernel = functools.partial(
        _focal_iou_kernel, gamma=gamma, binary_gt=binary_gt,
        tile_rows=tile_rows, last_chunk_rows=last_chunk_rows)

    acc_shape = jax.ShapeDtypeStruct((n, _SUBLANES, _LANES), jnp.float32)
    acc_spec = pl.BlockSpec((None, _SUBLANES, _LANES), lambda i, k: (i, 0, 0))
    in_spec = pl.BlockSpec((None, tile_rows, _LANES), lambda i, k: (i, k, 0))

    facc, pgacc, iacc = pl.pallas_call(
        kernel,
        out_shape=(acc_shape, acc_shape, acc_shape),
        grid_spec=pltpu.PrefetchScalarGridSpec(
            num_scalar_prefetch=0,
            grid=(n, num_k),
            in_specs=[in_spec, in_spec],
            out_specs=[acc_spec, acc_spec, acc_spec],
        ),
        compiler_params=pltpu.CompilerParams(
            dimension_semantics=("parallel", "arbitrary"),
            vmem_limit_bytes=vmem_limit_bytes),
    )(pred3, gt3)

    # Tiny finalize in plain JAX (n * 3 KiB of data): final XLU-style
    # reductions of the (8, 128) partials + the scalar blend.
    focal_scale = -alpha if binary_gt else alpha
    focal_mean = focal_scale * jnp.sum(facc) / jnp.float32(n * chw)
    inter = jnp.sum(iacc, axis=(1, 2))
    union = jnp.sum(pgacc, axis=(1, 2)) - inter
    jaccard = 1.0 - (inter + eps) / (union + eps)
    return focal_mean + jnp.mean(jaccard)


def _reference(pred, gt, alpha=ALPHA, gamma=GAMMA, eps=EPS):
    pred = pred.astype(jnp.float32)
    gt = gt.astype(jnp.float32)
    log_p = jnp.maximum(jnp.log(pred), -100.0)
    log_1mp = jnp.maximum(jnp.log(1.0 - pred), -100.0)
    bce = -(gt * log_p + (1.0 - gt) * log_1mp)
    pt = jnp.where(gt == 1.0, pred, 1.0 - pred)
    focal = alpha * (1.0 - pt) ** gamma * bce
    inter = jnp.sum(pred * gt, axis=(1, 2, 3))
    union = jnp.sum(pred + gt - pred * gt, axis=(1, 2, 3))
    jacc = 1.0 - (inter + eps) / (union + eps)
    return jnp.mean(focal) + jnp.mean(jacc)


if __name__ == "__main__":
    key = jax.random.PRNGKey(0)
    ks = jax.random.split(key, 8)

    def check(out, ref, tag):
        assert jnp.allclose(out, ref, rtol=1e-5, atol=1e-5), (tag, out, ref)

    # Case 1: shapes implied by the module (batch=2, channels=4, spatial=16);
    # CHW == 1024 -> no padding, single reduction chunk.
    pred = jax.nn.sigmoid(jax.random.normal(ks[0], (2, 4, 16, 16), jnp.float32))
    gt = (jax.random.uniform(ks[1], (2, 4, 16, 16)) > 0.5).astype(jnp.float32)
    out = jax.block_until_ready(binary_focal_iou(pred, gt))
    check(out, _reference(pred, gt), "case1")

    # Case 2: non-128-multiple CHW (padding path) + two evenly split reduction
    # chunks (accumulator init/accumulate across the k axis).
    pred2 = jax.nn.sigmoid(jax.random.normal(ks[2], (2, 3, 20, 20), jnp.float32))
    gt2 = (jax.random.uniform(ks[3], (2, 3, 20, 20)) > 0.5).astype(jnp.float32)
    out2 = jax.block_until_ready(binary_focal_iou(pred2, gt2, max_tile_rows=8))
    check(out2, _reference(pred2, gt2), "case2")

    # Case 3: ragged last reduction chunk (24 rows, tile 16) -> in-kernel mask.
    pred3 = jax.nn.sigmoid(jax.random.normal(ks[4], (2, 3, 32, 32), jnp.float32))
    gt3 = (jax.random.uniform(ks[5], (2, 3, 32, 32)) > 0.5).astype(jnp.float32)
    out3 = jax.block_until_ready(binary_focal_iou(pred3, gt3, max_tile_rows=16))
    check(out3, _reference(pred3, gt3), "case3")

    # Case 4: soft labels (binary_gt=False) exercise the exact two-log BCE.
    gt4 = jax.random.uniform(ks[6], (2, 4, 16, 16), jnp.float32)
    out4 = jax.block_until_ready(binary_focal_iou(pred, gt4, binary_gt=False))
    check(out4, _reference(pred, gt4), "case4")

    # Case 5: bf16 inputs fed at native width (half the HBM traffic).
    pred5, gt5 = pred.astype(jnp.bfloat16), gt.astype(jnp.bfloat16)
    out5 = jax.block_until_ready(binary_focal_iou(pred5, gt5))
    check(out5, _reference(pred5, gt5), "case5")

    print("KERNEL_OK")
</pallas_src>

<mosaic_0001>
module attributes {stable_mosaic.version = 11 : i64} {
  func.func @_focal_iou_kernel(%arg0: i32, %arg1: i32, %arg2: memref<1x8x128xf32, #tpu.memory_space<vmem>>, %arg3: memref<1x8x128xf32, #tpu.memory_space<vmem>>, %arg4: memref<1x8x128xf32, #tpu.memory_space<vmem>>, %arg5: memref<1x8x128xf32, #tpu.memory_space<vmem>>, %arg6: memref<1x8x128xf32, #tpu.memory_space<vmem>>) attributes {dimension_semantics = [#tpu.dimension_semantics<parallel>, #tpu.dimension_semantics<arbitrary>], iteration_bounds = array<i64: 2, 1>, scalar_prefetch = 0 : i64, scratch_operands = 0 : i64, tpu.core_type = #tpu.core_type<tc>, window_params = [{transform_indices = @transform_0, window_bounds = array<i64: 1, 8, 128>}, {transform_indices = @transform_1, window_bounds = array<i64: 1, 8, 128>}, {transform_indices = @transform_2, window_bounds = array<i64: 1, 8, 128>}, {transform_indices = @transform_3, window_bounds = array<i64: 1, 8, 128>}, {transform_indices = @transform_4, window_bounds = array<i64: 1, 8, 128>}]} {
    %c0_i32 = arith.constant 0 : i32
    %0 = arith.cmpi eq, %arg1, %c0_i32 : i32
    %1 = arith.extui %0 : i1 to i32
    %c0_i32_0 = arith.constant 0 : i32
    %2 = arith.cmpi ne, %1, %c0_i32_0 : i32
    scf.if %2 {
      %cst_30 = arith.constant 0.000000e+00 : f32
      %45 = vector.broadcast %cst_30 : f32 to vector<8x128xf32>
      %c0_31 = arith.constant 0 : index
      %c0_32 = arith.constant 0 : index
      %c0_33 = arith.constant 0 : index
      %46 = vector.load %arg4[%c0_31, %c0_32, %c0_33] : memref<1x8x128xf32, #tpu.memory_space<vmem>>, vector<1x8x128xf32>
      %47 = vector.shape_cast %46 : vector<1x8x128xf32> to vector<8x128xf32>
      %48 = vector.shape_cast %45 : vector<8x128xf32> to vector<1x8x128xf32>
      tpu.vector_store %arg4[%c0_31, %c0_32, %c0_33], %48 {strides = array<i32>} : memref<1x8x128xf32, #tpu.memory_space<vmem>>, vector<1x8x128xf32>,
      %cst_34 = arith.constant 0.000000e+00 : f32
      %49 = vector.broadcast %cst_34 : f32 to vector<8x128xf32>
      %c0_35 = arith.constant 0 : index
      %c0_36 = arith.constant 0 : index
      %c0_37 = arith.constant 0 : index
      %50 = vector.load %arg5[%c0_35, %c0_36, %c0_37] : memref<1x8x128xf32, #tpu.memory_space<vmem>>, vector<1x8x128xf32>
      %51 = vector.shape_cast %50 : vector<1x8x128xf32> to vector<8x128xf32>
      %52 = vector.shape_cast %49 : vector<8x128xf32> to vector<1x8x128xf32>
      tpu.vector_store %arg5[%c0_35, %c0_36, %c0_37], %52 {strides = array<i32>} : memref<1x8x128xf32, #tpu.memory_space<vmem>>, vector<1x8x128xf32>,
      %cst_38 = arith.constant 0.000000e+00 : f32
      %53 = vector.broadcast %cst_38 : f32 to vector<8x128xf32>
      %c0_39 = arith.constant 0 : index
      %c0_40 = arith.constant 0 : index
      %c0_41 = arith.constant 0 : index
      %54 = vector.load %arg6[%c0_39, %c0_40, %c0_41] : memref<1x8x128xf32, #tpu.memory_space<vmem>>, vector<1x8x128xf32>
      %55 = vector.shape_cast %54 : vector<1x8x128xf32> to vector<8x128xf32>
      %56 = vector.shape_cast %53 : vector<8x128xf32> to vector<1x8x128xf32>
      tpu.vector_store %arg6[%c0_39, %c0_40, %c0_41], %56 {strides = array<i32>} : memref<1x8x128xf32, #tpu.memory_space<vmem>>, vector<1x8x128xf32>,
    } else {
    }
    %c0 = arith.constant 0 : index
    %c0_1 = arith.constant 0 : index
    %c0_2 = arith.constant 0 : index
    %3 = vector.load %arg2[%c0, %c0_1, %c0_2] : memref<1x8x128xf32, #tpu.memory_space<vmem>>, vector<1x8x128xf32>
    %4 = vector.shape_cast %3 : vector<1x8x128xf32> to vector<8x128xf32>
    %c0_3 = arith.constant 0 : index
    %c0_4 = arith.constant 0 : index
    %c0_5 = arith.constant 0 : index
    %5 = vector.load %arg3[%c0_3, %c0_4, %c0_5] : memref<1x8x128xf32, #tpu.memory_space<vmem>>, vector<1x8x128xf32>
    %6 = vector.shape_cast %5 : vector<1x8x128xf32> to vector<8x128xf32>
    %cst = arith.constant 1.000000e+00 : f32
    %7 = vector.broadcast %cst : f32 to vector<8x128xf32>
    %8 = arith.cmpf oeq, %6, %7 : vector<8x128xf32>
    %cst_6 = arith.constant 1.000000e+00 : f32
    %9 = vector.broadcast %cst_6 : f32 to vector<8x128xf32>
    %10 = arith.subf %9, %4 : vector<8x128xf32>
    %11 = arith.select %8, %4, %10 : vector<8x128xi1>, vector<8x128xf32>
    %cst_7 = arith.constant 1.000000e+00 : f32
    %12 = vector.broadcast %cst_7 : f32 to vector<8x128xf32>
    %13 = arith.subf %12, %11 : vector<8x128xf32>
    %14 = arith.mulf %13, %13 : vector<8x128xf32>
    %15 = math.log %11 : vector<8x128xf32>
    %cst_8 = arith.constant -1.000000e+02 : f32
    %16 = vector.broadcast %cst_8 : f32 to vector<8x128xf32>
    %17 = arith.maximumf %15, %16 : vector<8x128xf32>
    %18 = arith.mulf %14, %17 : vector<8x128xf32>
    %c0_9 = arith.constant 0 : index
    %c0_10 = arith.constant 0 : index
    %c0_11 = arith.constant 0 : index
    %19 = vector.load %arg4[%c0_9, %c0_10, %c0_11] : memref<1x8x128xf32, #tpu.memory_space<vmem>>, vector<1x8x128xf32>
    %20 = vector.shape_cast %19 : vector<1x8x128xf32> to vector<8x128xf32>
    %21 = vector.shape_cast %18 : vector<8x128xf32> to vector<1x8x128xf32>
    %cst_12 = arith.constant dense<0.000000e+00> : vector<8x128xf32>
    %22 = vector.multi_reduction <add>, %21, %cst_12 [0] : vector<1x8x128xf32> to vector<8x128xf32>
    %23 = arith.addf %20, %22 : vector<8x128xf32>
    %c0_13 = arith.constant 0 : index
    %c0_14 = arith.constant 0 : index
    %c0_15 = arith.constant 0 : index
    %24 = vector.load %arg4[%c0_13, %c0_14, %c0_15] : memref<1x8x128xf32, #tpu.memory_space<vmem>>, vector<1x8x128xf32>
    %25 = vector.shape_cast %24 : vector<1x8x128xf32> to vector<8x128xf32>
    %26 = vector.shape_cast %23 : vector<8x128xf32> to vector<1x8x128xf32>
    tpu.vector_store %arg4[%c0_13, %c0_14, %c0_15], %26 {strides = array<i32>} : memref<1x8x128xf32, #tpu.memory_space<vmem>>, vector<1x8x128xf32>,
    %c0_16 = arith.constant 0 : index
    %c0_17 = arith.constant 0 : index
    %c0_18 = arith.constant 0 : index
    %27 = vector.load %arg5[%c0_16, %c0_17, %c0_18] : memref<1x8x128xf32, #tpu.memory_space<vmem>>, vector<1x8x128xf32>
    %28 = vector.shape_cast %27 : vector<1x8x128xf32> to vector<8x128xf32>
    %29 = arith.addf %4, %6 : vector<8x128xf32>
    %30 = vector.shape_cast %29 : vector<8x128xf32> to vector<1x8x128xf32>
    %cst_19 = arith.constant dense<0.000000e+00> : vector<8x128xf32>
    %31 = vector.multi_reduction <add>, %30, %cst_19 [0] : vector<1x8x128xf32> to vector<8x128xf32>
    %32 = arith.addf %28, %31 : vector<8x128xf32>
    %c0_20 = arith.constant 0 : index
    %c0_21 = arith.constant 0 : index
    %c0_22 = arith.constant 0 : index
    %33 = vector.load %arg5[%c0_20, %c0_21, %c0_22] : memref<1x8x128xf32, #tpu.memory_space<vmem>>, vector<1x8x128xf32>
    %34 = vector.shape_cast %33 : vector<1x8x128xf32> to vector<8x128xf32>
    %35 = vector.shape_cast %32 : vector<8x128xf32> to vector<1x8x128xf32>
    tpu.vector_store %arg5[%c0_20, %c0_21, %c0_22], %35 {strides = array<i32>} : memref<1x8x128xf32, #tpu.memory_space<vmem>>, vector<1x8x128xf32>,
    %c0_23 = arith.constant 0 : index
    %c0_24 = arith.constant 0 : index
    %c0_25 = arith.constant 0 : index
    %36 = vector.load %arg6[%c0_23, %c0_24, %c0_25] : memref<1x8x128xf32, #tpu.memory_space<vmem>>, vector<1x8x128xf32>
    %37 = vector.shape_cast %36 : vector<1x8x128xf32> to vector<8x128xf32>
    %38 = arith.mulf %4, %6 : vector<8x128xf32>
    %39 = vector.shape_cast %38 : vector<8x128xf32> to vector<1x8x128xf32>
    %cst_26 = arith.constant dense<0.000000e+00> : vector<8x128xf32>
    %40 = vector.multi_reduction <add>, %39, %cst_26 [0] : vector<1x8x128xf32> to vector<8x128xf32>
    %41 = arith.addf %37, %40 : vector<8x128xf32>
    %c0_27 = arith.constant 0 : index
    %c0_28 = arith.constant 0 : index
    %c0_29 = arith.constant 0 : index
    %42 = vector.load %arg6[%c0_27, %c0_28, %c0_29] : memref<1x8x128xf32, #tpu.memory_space<vmem>>, vector<1x8x128xf32>
    %43 = vector.shape_cast %42 : vector<1x8x128xf32> to vector<8x128xf32>
    %44 = vector.shape_cast %41 : vector<8x128xf32> to vector<1x8x128xf32>
    tpu.vector_store %arg6[%c0_27, %c0_28, %c0_29], %44 {strides = array<i32>} : memref<1x8x128xf32, #tpu.memory_space<vmem>>, vector<1x8x128xf32>,
    return
  }
  func.func @transform_0(%arg0: i32, %arg1: i32) -> (i32, i32, i32) {
    %c0_i32 = arith.constant 0 : i32
    %c0_i32_0 = arith.constant 0 : i32
    return %arg0, %arg1, %c0_i32 : i32, i32, i32
  }
  func.func @transform_1(%arg0: i32, %arg1: i32) -> (i32, i32, i32) {
    %c0_i32 = arith.constant 0 : i32
    %c0_i32_0 = arith.constant 0 : i32
    return %arg0, %arg1, %c0_i32 : i32, i32, i32
  }
  func.func @transform_2(%arg0: i32, %arg1: i32) -> (i32, i32, i32) {
    %c0_i32 = arith.constant 0 : i32
    %c0_i32_0 = arith.constant 0 : i32
    %c0_i32_1 = arith.constant 0 : i32
    return %arg0, %c0_i32, %c0_i32_0 : i32, i32, i32
  }
  func.func @transform_3(%arg0: i32, %arg1: i32) -> (i32, i32, i32) {
    %c0_i32 = arith.constant 0 : i32
    %c0_i32_0 = arith.constant 0 : i32
    %c0_i32_1 = arith.constant 0 : i32
    return %arg0, %c0_i32, %c0_i32_0 : i32, i32, i32
  }
  func.func @transform_4(%arg0: i32, %arg1: i32) -> (i32, i32, i32) {
    %c0_i32 = arith.constant 0 : i32
    %c0_i32_0 = arith.constant 0 : i32
    %c0_i32_1 = arith.constant 0 : i32
    return %arg0, %c0_i32, %c0_i32_0 : i32, i32, i32
  }
}

</mosaic_0001>

<llo_original>
// kernel: tpu_custom_call.1
$region0: #{tpu_custom_call.1}
  #allocation0 [shape = 'u32[]', space=smem, size = 0x4, offset = 0x4, fixed_abs, tag = 'smem constant byte address 0x4 - core index']
  #allocation1 [shape = 'u32[72,128]{1,0:T(1,128)}', space=vmem, size = 0x9000, scoped, tag = 'internal scratch']
  %s0 = inlined_call_operand.hbm [shape: f32[2,8,128], index: 0, kind: input, shape index: {}]
  %s1 = inlined_call_operand.hbm [shape: f32[2,8,128], index: 1, kind: input, shape index: {}]
  %s2 = inlined_call_operand.hbm [shape: f32[2,8,128], index: 2, kind: output, shape index: {0}]
  %s3 = inlined_call_operand.hbm [shape: f32[2,8,128], index: 3, kind: output, shape index: {1}]
  %s4 = inlined_call_operand.hbm [shape: f32[2,8,128], index: 4, kind: output, shape index: {2}]
  %5 = xla_tuple %s2, %s3, %s4
  %s6 = sld [smem:[#allocation0]]
  $region69: #{tpu_custom_call.1} parent=0
    _
  %s8 = ssub.s32 1, %s6
  %s9 = scalar_select 0, %s8, %s6
  $region1: #{tpu_custom_call.1} parent=0
    #allocation2 [shape = 'u8[8192]{0}', space=vmem, size = 0x2000, scoped, tag = 'input window, operand 0']
    #allocation3 [shape = 's32[2]{0}', space=sflag, size = 0x8, scoped, tag = 'scoped memory for tpu_custom_call.1']
    #allocation4 [shape = 's32[2]{0}', space=sflag, size = 0x8, scoped, tag = 'scoped memory for tpu_custom_call.1']
    #allocation5 [shape = 'u8[8192]{0}', space=vmem, size = 0x2000, scoped, tag = 'input window, operand 1']
    #allocation6 [shape = 's32[2]{0}', space=sflag, size = 0x8, scoped, tag = 'scoped memory for tpu_custom_call.1']
    #allocation7 [shape = 'u8[8192]{0}', space=vmem, size = 0x2000, scoped, tag = 'output window, operand 0']
    #allocation8 [shape = 'u8[8192]{0}', space=vmem, size = 0x2000, scoped, tag = 'output window, operand 1']
    #allocation9 [shape = 's32[2]{0}', space=sflag, size = 0x8, scoped, tag = 'scoped memory for tpu_custom_call.1']
    #allocation10 [shape = 'u8[8192]{0}', space=vmem, size = 0x2000, scoped, tag = 'output window, operand 2']
    %10 = vsyncpa [#allocation3], 0
    %s11 = scalar_lea.sflag [#allocation3], 1
    %12 = vsyncpa %s11, 0
    %13 = vsyncpa [#allocation6], 0
    %s14 = scalar_lea.sflag [#allocation6], 1
    %15 = vsyncpa %s14, 0
    %16 = vsyncpa [#allocation4], 0
    %s17 = scalar_lea.sflag [#allocation4], 1
    %18 = vsyncpa %s17, 0
    %19 = vsyncpa [#allocation9], 0
    %s20 = scalar_lea.sflag [#allocation9], 1
    %21 = vsyncpa %s20, 0
    loop: start=0, step=1, limit=4
    $region2: #{tpu_custom_call.1} parent=1 // loop_pre_header
      _
    $region3: #{tpu_custom_call.1} parent=1 // loop_header
      %s23 = sphi 0, %s27
      %p24 = scmp.ge.s32.totalorder %s23, 4
      %s30 = sphi 0, %s42
      %s31 = sphi 0, %s38
      %s32 = sphi 0, %s30
      %s33 = sphi 0, %s31
      %s34 = sphi 0, %s32
      %s35 = sphi 0, %s33
      %s47 = sphi 0, %s49
      %s50 = sphi 0, %s47
      %s51 = sphi 0, %s50
      %s67 = sphi 0, %s51
      %s75 = sphi 0, %s77
      %s78 = sphi 0, %s75
      %s79 = sphi 0, %s78
      %s95 = sphi 0, %s79
      %s101 = sphi 0, %s103
      %s104 = sphi 0, %s101
      %s105 = sphi 0, %s104
      %s121 = sphi 0, %s105
      %s127 = sphi 0, %s129
      %s130 = sphi 0, %s127
      %s131 = sphi 0, %s130
      %s147 = sphi 0, %s131
      %s153 = sphi 0, %s155
      %s156 = sphi 0, %s153
      %s157 = sphi 0, %s156
      %s173 = sphi 0, %s157
    $region4: #{tpu_custom_call.1} parent=1 // loop_header_branch
      %26 = sbr.rel (%p24) target = $region8
    $region5: #{tpu_custom_call.1} parent=1 // loop_body
      %s28 = ssub.s32 %s23, 1
      %s29 = ssub.s32 %s23, 2
      %s36 = sadd.s32 1, %s31
      %p37 = scmp.ge.s32.totalorder %s36, 1
      %s38 = scalar_select %p37, 0, %s36
      %s39 = sadd.s32 1, %s30
      %s40 = scalar_select %p37, %s39, %s30
      %p41 = scmp.ge.s32.totalorder %s40, 2
      %s42 = scalar_select %p41, 0, %s40
      %s43 = ssub.s32 %s30, %s42
      %s44 = ssub.s32 %s31, %s38
      %s45 = sor.u32 %s43, %s44
      %p46 = scmp.eq.s32.totalorder %s45, 0
      %s48 = sadd.s32 %s47, 1
      %s49 = scalar_select %p46, %s47, %s48
      %p52 = pneg %p46
      %p53 = scmp.eq.s32.totalorder %s23, 1
      %p54 = por %p52, %p53
      %p55 = scmp.ne.s32.totalorder %s47, %s50
      %p56 = scmp.eq.s32.totalorder %s23, 0
      %p57 = por %p55, %p56
      %p58 = scmp.ne.s32.totalorder %s47, %s50
      %p59 = scmp.eq.s32.totalorder %s28, 1
      %p60 = por %p58, %p59
      %p61 = scmp.ne.s32.totalorder %s50, %s51
      %p62 = scmp.eq.s32.totalorder %s28, 0
      %p63 = por %p61, %p62
      %p64 = scmp.ne.s32.totalorder %s50, %s51
      %p65 = scmp.eq.s32.totalorder %s29, 1
      %p66 = por %p64, %p65
      %p68 = scmp.ne.s32.totalorder %s51, %s67
      %p69 = scmp.eq.s32.totalorder %s29, 0
      %p70 = por %p68, %p69
      %s71 = ssub.s32 %s30, %s42
      %s72 = ssub.s32 %s31, %s38
      %s73 = sor.u32 %s71, %s72
      %p74 = scmp.eq.s32.totalorder %s73, 0
      %s76 = sadd.s32 %s75, 1
      %s77 = scalar_select %p74, %s75, %s76
      %p80 = pneg %p74
      %p81 = scmp.eq.s32.totalorder %s23, 1
      %p82 = por %p80, %p81
      %p83 = scmp.ne.s32.totalorder %s75, %s78
      %p84 = scmp.eq.s32.totalorder %s23, 0
      %p85 = por %p83, %p84
      %p86 = scmp.ne.s32.totalorder %s75, %s78
      %p87 = scmp.eq.s32.totalorder %s28, 1
      %p88 = por %p86, %p87
      %p89 = scmp.ne.s32.totalorder %s78, %s79
      %p90 = scmp.eq.s32.totalorder %s28, 0
      %p91 = por %p89, %p90
      %p92 = scmp.ne.s32.totalorder %s78, %s79
      %p93 = scmp.eq.s32.totalorder %s29, 1
      %p94 = por %p92, %p93
      %p96 = scmp.ne.s32.totalorder %s79, %s95
      %p97 = scmp.eq.s32.totalorder %s29, 0
      %p98 = por %p96, %p97
      %s99 = ssub.s32 %s30, %s42
      %p100 = scmp.eq.s32.totalorder %s99, 0
      %s102 = sadd.s32 %s101, 1
      %s103 = scalar_select %p100, %s101, %s102
      %p106 = pneg %p100
      %p107 = scmp.eq.s32.totalorder %s23, 1
      %p108 = por %p106, %p107
      %p109 = scmp.ne.s32.totalorder %s101, %s104
      %p110 = scmp.eq.s32.totalorder %s23, 0
      %p111 = por %p109, %p110
      %p112 = scmp.ne.s32.totalorder %s101, %s104
      %p113 = scmp.eq.s32.totalorder %s28, 1
      %p114 = por %p112, %p113
      %p115 = scmp.ne.s32.totalorder %s104, %s105
      %p116 = scmp.eq.s32.totalorder %s28, 0
      %p117 = por %p115, %p116
      %p118 = scmp.ne.s32.totalorder %s104, %s105
      %p119 = scmp.eq.s32.totalorder %s29, 1
      %p120 = por %p118, %p119
      %p122 = scmp.ne.s32.totalorder %s105, %s121
      %p123 = scmp.eq.s32.totalorder %s29, 0
      %p124 = por %p122, %p123
      %s125 = ssub.s32 %s30, %s42
      %p126 = scmp.eq.s32.totalorder %s125, 0
      %s128 = sadd.s32 %s127, 1
      %s129 = scalar_select %p126, %s127, %s128
      %p132 = pneg %p126
      %p133 = scmp.eq.s32.totalorder %s23, 1
      %p134 = por %p132, %p133
      %p135 = scmp.ne.s32.totalorder %s127, %s130
      %p136 = scmp.eq.s32.totalorder %s23, 0
      %p137 = por %p135, %p136
      %p138 = scmp.ne.s32.totalorder %s127, %s130
      %p139 = scmp.eq.s32.totalorder %s28, 1
      %p140 = por %p138, %p139
      %p141 = scmp.ne.s32.totalorder %s130, %s131
      %p142 = scmp.eq.s32.totalorder %s28, 0
      %p143 = por %p141, %p142
      %p144 = scmp.ne.s32.totalorder %s130, %s131
      %p145 = scmp.eq.s32.totalorder %s29, 1
      %p146 = por %p144, %p145
      %p148 = scmp.ne.s32.totalorder %s131, %s147
      %p149 = scmp.eq.s32.totalorder %s29, 0
      %p150 = por %p148, %p149
      %s151 = ssub.s32 %s30, %s42
      %p152 = scmp.eq.s32.totalorder %s151, 0
      %s154 = sadd.s32 %s153, 1
      %s155 = scalar_select %p152, %s153, %s154
      %p158 = pneg %p152
      %p159 = scmp.eq.s32.totalorder %s23, 1
      %p160 = por %p158, %p159
      %p161 = scmp.ne.s32.totalorder %s153, %s156
      %p162 = scmp.eq.s32.totalorder %s23, 0
      %p163 = por %p161, %p162
      %p164 = scmp.ne.s32.totalorder %s153, %s156
      %p165 = scmp.eq.s32.totalorder %s28, 1
      %p166 = por %p164, %p165
      %p167 = scmp.ne.s32.totalorder %s156, %s157
      %p168 = scmp.eq.s32.totalorder %s28, 0
      %p169 = por %p167, %p168
      %p170 = scmp.ne.s32.totalorder %s156, %s157
      %p171 = scmp.eq.s32.totalorder %s29, 1
      %p172 = por %p170, %p171
      %p174 = scmp.ne.s32.totalorder %s157, %s173
      %p175 = scmp.eq.s32.totalorder %s29, 0
      %p176 = por %p174, %p175
      %p177 = scmp.le.s32.totalorder 1, %s23
      %p178 = scmp.lt.s32.totalorder %s23, 3
      %p179 = pnand %p177, %p178
      %p180 = pneg %p179
      // Predicated region
      $region9: #{tpu_custom_call.1} parent=5 // pred_check
        _
      $region10: #{tpu_custom_call.1} parent=5 // pred_check_branch
        %182 = sbr.rel (%p179) target = $region12
      $region11: #{tpu_custom_call.1} parent=5 // pred_region
        %s183 = ssub.s32 %s23, 1
      $region12: #{tpu_custom_call.1} parent=5 // pred_fallthru
        _
      %p184 = scmp.lt.s32.totalorder %s23, 2
      // Predicated region
      $region13: #{tpu_custom_call.1} parent=5 // pred_check
        %p185 = pneg %p184
      $region14: #{tpu_custom_call.1} parent=5 // pred_check_branch
        %187 = sbr.rel (%p185) target = $region16
      $region15: #{tpu_custom_call.1} parent=5 // pred_region
        // Predicated region
        $region17: #{tpu_custom_call.1} parent=15 // pred_check
          %p188 = pneg %p57
        $region18: #{tpu_custom_call.1} parent=15 // pred_check_branch
          %190 = sbr.rel (%p188) target = $region20
        $region19: #{tpu_custom_call.1} parent=15 // pred_region
          %s191 = sand.u32 %s47, 1
          %s192 = scalar_lea.sflag [#allocation3], %s191
          %s193 = sand.u32 %s47, 1
          %s194 = smul.addr %s193, 8
          %s195 = scalar_lea.vmem [#allocation2], %s194
          %197 = vsyncadd %s192, 0
          %s198 = sadd.s32 %s31, %s30
          %s199 = smul.addr %s198, 8
          %s200 = scalar_lea.hbm %s0, %s199
          %s202 = sshll.u32 %s200, 4
          %s203 = int_to_ptr.hbm [resolvable:$true] %s202
          %s204 = sshll.u32 %s195, 4
          %s205 = int_to_ptr.vmem [resolvable:$true] %s204
          %207 = dma.hbm_to_vmem [thread:$0]  %s203, 128, %s205, %s192
        $region20: #{tpu_custom_call.1} parent=15 // pred_fallthru
          _
        // Predicated region
        $region21: #{tpu_custom_call.1} parent=15 // pred_check
          %p208 = pneg %p85
        $region22: #{tpu_custom_call.1} parent=15 // pred_check_branch
          %210 = sbr.rel (%p208) target = $region24
        $region23: #{tpu_custom_call.1} parent=15 // pred_region
          %s211 = sand.u32 %s75, 1
          %s212 = scalar_lea.sflag [#allocation6], %s211
          %s213 = sand.u32 %s75, 1
          %s214 = smul.addr %s213, 8
          %s215 = scalar_lea.vmem [#allocation5], %s214
          %217 = vsyncadd %s212, 0
          %s218 = sadd.s32 %s31, %s30
          %s219 = smul.addr %s218, 8
          %s220 = scalar_lea.hbm %s1, %s219
          %s222 = sshll.u32 %s220, 4
          %s223 = int_to_ptr.hbm [resolvable:$true] %s222
          %s224 = sshll.u32 %s215, 4
          %s225 = int_to_ptr.vmem [resolvable:$true] %s224
          %227 = dma.hbm_to_vmem [thread:$0]  %s223, 128, %s225, %s212
        $region24: #{tpu_custom_call.1} parent=15 // pred_fallthru
          _
      $region16: #{tpu_custom_call.1} parent=5 // pred_fallthru
        _
      %p228 = scmp.le.s32.totalorder 1, %s23
      %p229 = scmp.lt.s32.totalorder %s23, 3
      %p230 = pnand %p228, %p229
      %p231 = pneg %p230
      // Predicated region
      $region25: #{tpu_custom_call.1} parent=5 // pred_check
        _
      $region26: #{tpu_custom_call.1} parent=5 // pred_check_branch
        %233 = sbr.rel (%p230) target = $region28
      $region27: #{tpu_custom_call.1} parent=5 // pred_region
        %s234 = ssub.s32 %s23, 1
        %s235 = sand.u32 %s50, 1
        %s236 = scalar_lea.sflag [#allocation3], %s235
        %s237 = sand.u32 %s50, 1
        %s238 = smul.addr %s237, 8
        %s239 = scalar_lea.vmem [#allocation2], %s238
        // Predicated region
        $region29: #{tpu_custom_call.1} parent=27 // pred_check
          %p240 = pneg %p63
        $region30: #{tpu_custom_call.1} parent=27 // pred_check_branch
          %242 = sbr.rel (%p240) target = $region32
        $region31: #{tpu_custom_call.1} parent=27 // pred_region
          %244 = dma.done %s236, 128
        $region32: #{tpu_custom_call.1} parent=27 // pred_fallthru
          _
        %s245 = sand.u32 %s78, 1
        %s246 = scalar_lea.sflag [#allocation6], %s245
        %s247 = sand.u32 %s78, 1
        %s248 = smul.addr %s247, 8
        %s249 = scalar_lea.vmem [#allocation5], %s248
        // Predicated region
        $region33: #{tpu_custom_call.1} parent=27 // pred_check
          %p250 = pneg %p91
        $region34: #{tpu_custom_call.1} parent=27 // pred_check_branch
          %252 = sbr.rel (%p250) target = $region36
        $region35: #{tpu_custom_call.1} parent=27 // pred_region
          %254 = dma.done %s246, 128
        $region36: #{tpu_custom_call.1} parent=27 // pred_fallthru
          _
        %s255 = sand.u32 %s50, 1
        %s256 = scalar_lea.sflag [#allocation3], %s255
        %s257 = sand.u32 %s50, 1
        %s258 = smul.addr %s257, 8
        %s259 = scalar_lea.vmem [#allocation2], %s258
        %p260 = pneg %p63
        %p261 = pneg %p60
        %s262 = sand.u32 %s78, 1
        %s263 = scalar_lea.sflag [#allocation6], %s262
        %s264 = sand.u32 %s78, 1
        %s265 = smul.addr %s264, 8
        %s266 = scalar_lea.vmem [#allocation5], %s265
        %p267 = pneg %p91
        %p268 = pneg %p88
        %p269 = pneg %p117
        %p270 = pneg %p114
        %s271 = sand.u32 %s104, 1
        %s272 = scalar_lea.sflag [#allocation4], %s271
        %s273 = sand.u32 %s104, 1
        %s274 = smul.addr %s273, 8
        %s275 = scalar_lea.vmem [#allocation7], %s274
        %p276 = pneg %p143
        %p277 = pneg %p140
        %s278 = sand.u32 %s28, 1
        %s279 = scalar_lea.sflag [#allocation9], %s278
        %s280 = sand.u32 %s130, 1
        %s281 = smul.addr %s280, 8
        %s282 = scalar_lea.vmem [#allocation8], %s281
        %p283 = pneg %p169
        %p284 = pneg %p166
        %s285 = sand.u32 %s28, 1
        %s286 = scalar_lea.sflag [#allocation9], %s285
        %s287 = sand.u32 %s156, 1
        %s288 = smul.addr %s287, 8
        %s289 = scalar_lea.vmem [#allocation10], %s288
        %p290 = scmp.eq.s32.totalorder %s33, 0
        // Predicated region
        $region37: #{tpu_custom_call.1} parent=27 // pred_check
          %p291 = pneg %p290
        $region38: #{tpu_custom_call.1} parent=27 // pred_check_branch
          %293 = sbr.rel (%p291) target = $region40
        $region39: #{tpu_custom_call.1} parent=27 // pred_region
          %294 = vst [vmem:[%s275] sm:$0xff] 0.0
          %295 = vst [vmem:[%s282] sm:$0xff] 0.0
          %296 = vst [vmem:[%s289] sm:$0xff] 0.0
        $region40: #{tpu_custom_call.1} parent=27 // pred_fallthru
          _
        %v297 = vld [vmem:[%s239] sm:$0xff]
        %v298 = vld [vmem:[%s249] sm:$0xff]
        %vm299 = vcmp.eq.f32.partialorder %v298, 1.0
        %v300 = vsub.f32 1.0, %v297
        %v301 = vsel %vm299, %v297, %v300
        %v302 = vsub.f32 1.0, %v301
        %v303 = vmul.f32 %v302, %v302
        %v304 = vlog2.pop %v301
        %v305 = vmul.f32 %v304, 0.6931472
        %v306 = vmax.f32 %v305, -100.0
        %v307 = vmul.f32 %v303, %v306
        %v308 = vld [vmem:[%s275] sm:$0xff]
        %v309 = vadd.f32 %v307, 0.0
        %v310 = vadd.f32 %v308, %v309
        %311 = vst [vmem:[%s275] sm:$0xff] %v310
        %v312 = vld [vmem:[%s282] sm:$0xff]
        %v313 = vadd.f32 %v297, %v298
        %v314 = vadd.f32 %v313, 0.0
        %v315 = vadd.f32 %v312, %v314
        %316 = vst [vmem:[%s282] sm:$0xff] %v315
        %v317 = vld [vmem:[%s289] sm:$0xff]
        %v318 = vmul.f32 %v297, %v298
        %v319 = vadd.f32 %v318, 0.0
        %v320 = vadd.f32 %v317, %v319
        %321 = vst [vmem:[%s289] sm:$0xff] %v320
        %s322 = sand.u32 %s104, 1
        %s323 = scalar_lea.sflag [#allocation4], %s322
        %s324 = sand.u32 %s104, 1
        %s325 = smul.addr %s324, 8
        %s326 = scalar_lea.vmem [#allocation7], %s325
        %s327 = sand.u32 %s28, 1
        %s328 = scalar_lea.sflag [#allocation9], %s327
        %s329 = sand.u32 %s130, 1
        %s330 = smul.addr %s329, 8
        %s331 = scalar_lea.vmem [#allocation8], %s330
        %s332 = sand.u32 %s28, 1
        %s333 = scalar_lea.sflag [#allocation9], %s332
        %s334 = sand.u32 %s156, 1
        %s335 = smul.addr %s334, 8
        %s336 = scalar_lea.vmem [#allocation10], %s335
        // Predicated region
        $region41: #{tpu_custom_call.1} parent=27 // pred_check
          %p337 = pneg %p114
        $region42: #{tpu_custom_call.1} parent=27 // pred_check_branch
          %339 = sbr.rel (%p337) target = $region44
        $region43: #{tpu_custom_call.1} parent=27 // pred_region
          %341 = vsyncadd %s323, 0
          %s342 = smul.addr %s32, 8
          %s343 = scalar_lea.hbm %s2, %s342
          %s345 = sshll.u32 %s326, 4
          %s346 = int_to_ptr.vmem [resolvable:$true] %s345
          %s347 = sshll.u32 %s343, 4
          %s348 = int_to_ptr.hbm [resolvable:$true] %s347
          %350 = dma.vmem_to_hbm [thread:$0]  %s346, 128, %s348, %s323
        $region44: #{tpu_custom_call.1} parent=27 // pred_fallthru
          _
        // Predicated region
        $region45: #{tpu_custom_call.1} parent=27 // pred_check
          %p351 = pneg %p140
        $region46: #{tpu_custom_call.1} parent=27 // pred_check_branch
          %353 = sbr.rel (%p351) target = $region48
        $region47: #{tpu_custom_call.1} parent=27 // pred_region
          %355 = vsyncadd %s328, 0
          %s356 = smul.addr %s32, 8
          %s357 = scalar_lea.hbm %s3, %s356
          %s359 = sshll.u32 %s331, 4
          %s360 = int_to_ptr.vmem [resolvable:$true] %s359
          %s361 = sshll.u32 %s357, 4
          %s362 = int_to_ptr.hbm [resolvable:$true] %s361
          %364 = dma.vmem_to_hbm [thread:$0]  %s360, 128, %s362, %s328
        $region48: #{tpu_custom_call.1} parent=27 // pred_fallthru
          _
        // Predicated region
        $region49: #{tpu_custom_call.1} parent=27 // pred_check
          %p365 = pneg %p166
        $region50: #{tpu_custom_call.1} parent=27 // pred_check_branch
          %367 = sbr.rel (%p365) target = $region52
        $region51: #{tpu_custom_call.1} parent=27 // pred_region
          %369 = vsyncadd %s333, 0
          %s370 = smul.addr %s32, 8
          %s371 = scalar_lea.hbm %s4, %s370
          %s373 = sshll.u32 %s336, 4
          %s374 = int_to_ptr.vmem [resolvable:$true] %s373
          %s375 = sshll.u32 %s371, 4
          %s376 = int_to_ptr.hbm [resolvable:$true] %s375
          %378 = dma.vmem_to_hbm [thread:$0]  %s374, 128, %s376, %s333
        $region52: #{tpu_custom_call.1} parent=27 // pred_fallthru
          _
      $region28: #{tpu_custom_call.1} parent=5 // pred_fallthru
        _
      %p379 = scmp.le.s32.totalorder 2, %s23
      // Predicated region
      $region53: #{tpu_custom_call.1} parent=5 // pred_check
        %p380 = pneg %p379
      $region54: #{tpu_custom_call.1} parent=5 // pred_check_branch
        %382 = sbr.rel (%p380) target = $region56
      $region55: #{tpu_custom_call.1} parent=5 // pred_region
        %s383 = ssub.s32 %s23, 2
        // Predicated region
        $region57: #{tpu_custom_call.1} parent=55 // pred_check
          %p384 = pneg %p120
        $region58: #{tpu_custom_call.1} parent=55 // pred_check_branch
          %386 = sbr.rel (%p384) target = $region60
        $region59: #{tpu_custom_call.1} parent=55 // pred_region
          %s387 = sand.u32 %s105, 1
          %s388 = scalar_lea.sflag [#allocation4], %s387
          %s389 = sand.u32 %s105, 1
          %s390 = smul.addr %s389, 8
          %s391 = scalar_lea.vmem [#allocation7], %s390
          %393 = dma.done %s388, 128
        $region60: #{tpu_custom_call.1} parent=55 // pred_fallthru
          _
        // Predicated region
        $region61: #{tpu_custom_call.1} parent=55 // pred_check
          %p394 = pneg %p146
        $region62: #{tpu_custom_call.1} parent=55 // pred_check_branch
          %396 = sbr.rel (%p394) target = $region64
        $region63: #{tpu_custom_call.1} parent=55 // pred_region
          %s397 = sand.u32 %s29, 1
          %s398 = scalar_lea.sflag [#allocation9], %s397
          %s399 = sand.u32 %s131, 1
          %s400 = smul.addr %s399, 8
          %s401 = scalar_lea.vmem [#allocation8], %s400
          %403 = dma.done %s398, 128
        $region64: #{tpu_custom_call.1} parent=55 // pred_fallthru
          _
        // Predicated region
        $region65: #{tpu_custom_call.1} parent=55 // pred_check
          %p404 = pneg %p172
        $region66: #{tpu_custom_call.1} parent=55 // pred_check_branch
          %406 = sbr.rel (%p404) target = $region68
        $region67: #{tpu_custom_call.1} parent=55 // pred_region
          %s407 = sand.u32 %s29, 1
          %s408 = scalar_lea.sflag [#allocation9], %s407
          %s409 = sand.u32 %s157, 1
          %s410 = smul.addr %s409, 8
          %s411 = scalar_lea.vmem [#allocation10], %s410
          %413 = dma.done %s408, 128
        $region68: #{tpu_custom_call.1} parent=55 // pred_fallthru
          _
      $region56: #{tpu_custom_call.1} parent=5 // pred_fallthru
        _
    $region6: #{tpu_custom_call.1} parent=1 // loop_footer
      %s27 = sadd.s32 1, %s23
    $region7: #{tpu_custom_call.1} parent=1 // loop_footer_branch
      %22 = sbr.rel target = $region3
    $region8: #{tpu_custom_call.1} parent=1 // loop_exit
      _
    %414 = vsyncpa [#allocation3], 1
    %s415 = scalar_lea.sflag [#allocation3], 1
    %416 = vsyncpa %s415, 1
    %417 = vsyncpa [#allocation6], 1
    %s418 = scalar_lea.sflag [#allocation6], 1
    %419 = vsyncpa %s418, 1
    %420 = vsyncpa [#allocation4], 1
    %s421 = scalar_lea.sflag [#allocation4], 1
    %422 = vsyncpa %s421, 1
    %423 = vsyncpa [#allocation9], 1
    %s424 = scalar_lea.sflag [#allocation9], 1
    %425 = vsyncpa %s424, 1

</llo_original>
